<compile_context>
chip_gen: v6e
topology: v6e:2x2x1
jax: 0.10.0
libtpu: 0.0.40
codegen_flags: <defaults>
</compile_context>

<pallas_src>
from typing import NamedTuple

import jax
import jax.numpy as jnp
from jax.experimental import pallas as pl
from jax.experimental.pallas import tpu as pltpu


def _round_up(x: int, m: int) -> int:
    return ((x + m - 1) // m) * m


_MAX_BATCH_TILE = 2048


def _pick_batch_tile(batch: int) -> int:
    """Evenly-split batch tiles, capped at ~2048 rows.

    Only activations scale with the tile ((Bt,D_in)+(Bt,P) double-buffered is
    <3 MiB even at Bt=2048, P=128), so VMEM is not the limiter; bigger tiles
    amortize the ~0.35 us/grid-step pipeline overhead.  When more than one
    tile is needed, round the tile COUNT up to an even number so the
    "parallel" batch axis balances across v7x's two TensorCores.
    """
    n_tiles = max(1, -(-batch // _MAX_BATCH_TILE))
    if n_tiles > 1 and (n_tiles % 2):
        n_tiles += 1
    bt = _round_up(-(-batch // n_tiles), 8)
    return min(bt, _round_up(batch, 8))


def _const_spec(block_shape, index_map) -> pl.BlockSpec:
    """BlockSpec for a constant-index (VMEM-resident) input.

    Single-buffered: the block index never changes, so double-buffering only
    doubles resident weight VMEM (critical on v7x's 64 MiB for wide nets).
    Falls back to the default spec if this Pallas version lacks the knob.
    """
    try:
        return pl.BlockSpec(block_shape, index_map, pipeline_mode=pl.Buffered(1))
    except (TypeError, AttributeError):
        return pl.BlockSpec(block_shape, index_map)


def _activation_dtype(use_bf16_matmul: bool):
    """tanh/activation dtype: bf16 on v6e/v7x (bf16 EUP), f32 elsewhere."""
    if not use_bf16_matmul:
        return jnp.float32
    try:
        kind = jax.devices()[0].device_kind.lower()
    except Exception:  # pragma: no cover - device query failure
        kind = ""
    if ("v6" in kind) or ("v7" in kind):
        return jnp.bfloat16
    return jnp.float32


# ----------------------------------------------------------------------------
# Pallas kernel: whole (fused) actor-critic forward pass
# ----------------------------------------------------------------------------
def _make_fused_mlp_kernel(num_layers: int, act_dtype):
    """Kernel over refs (x, w0, w_rest, b, out).

    x      : (Bt, D_in)           activations tile
    w0     : (D_in, P)            first layer weight (input width unpadded)
    w_rest : (max(L-1,1), P, P)   remaining layers, padded to P x P
    b      : (L, P) f32           all biases, padded
    out    : (Bt, P) f32          fused [pi | vf | zero-pad] output tile
    """

    def kernel(x_ref, w0_ref, wrest_ref, b_ref, out_ref):
        w0 = w0_ref[...]
        # MXU matmul with f32 accumulation; bias add stays in f32.  tanh runs
        # in act_dtype (bf16 on v6e/v7x -> 2x EUP throughput; f32 on v5e).
        h = jnp.dot(x_ref[...].astype(w0.dtype), w0,
                    preferred_element_type=jnp.float32)
        h = jnp.tanh((h + b_ref[pl.ds(0, 1), :]).astype(act_dtype))

        # Static unroll over the (few) remaining layers.  When act_dtype ==
        # weight dtype the per-layer astype is a no-op (elided).
        for l in range(1, num_layers):
            w = wrest_ref[l - 1]
            h = jnp.dot(h.astype(w.dtype), w, preferred_element_type=jnp.float32)
            h = jnp.tanh((h + b_ref[pl.ds(l, 1), :]).astype(act_dtype))

        out_ref[...] = h.astype(out_ref.dtype)

    return kernel


# ----------------------------------------------------------------------------
# One-time parameter packing (transpose, head fusion, lane padding)
# ----------------------------------------------------------------------------
class PackedParams(NamedTuple):
    w0: jax.Array       # (D_in, P)
    w_rest: jax.Array   # (max(L-1, 1), P, P)
    b: jax.Array        # (L, P) f32
    num_layers: int
    width: int          # P (padded hidden width, multiple of 128)
    in_dim: int         # D_in
    pi_dim: int         # fused-slab columns [0:pi_dim]            -> latent_pi
    vf_dim: int         # fused-slab columns [pi_dim:pi_dim+vf_dim] -> latent_vf


def prepare_params(feature_dim, shared_params, pi_params, vf_params,
                   *, use_bf16_matmul: bool = True) -> PackedParams:
    """Build packed, lane-aligned parameters ONCE (not per forward call).

    *_params: lists of (W(out,in), b(out,)) tuples in PyTorch layout.
    bf16 MXU operands are the default (f32 accumulate in-kernel); pass
    use_bf16_matmul=False for bit-faithful f32 matmuls.
    """
    assert len(pi_params) >= 1 and len(vf_params) >= 1
    # Head fusion requires equal pi/vf depths (the standard SB3-style config).
    assert len(pi_params) == len(vf_params), (
        "fused pi/vf heads require equal head depths")

    def to_io(w, b):
        return jnp.asarray(w, jnp.float32).T, jnp.asarray(b, jnp.float32)

    layers = []  # list of (W (in,out), b (out,)) for the fused sequential chain
    last_shared = feature_dim
    for (w, b) in shared_params:
        W, bb = to_io(w, b)
        layers.append((W, bb))
        last_shared = W.shape[1]

    # PyTorch quirk check: heads were built with in=feature_dim but forward()
    # feeds them `shared`; only consistent when last shared width == feature_dim.
    assert pi_params[0][0].shape[1] == last_shared, (
        "pi head input width must equal last shared width (PyTorch quirk)")
    assert vf_params[0][0].shape[1] == last_shared, (
        "vf head input width must equal last shared width (PyTorch quirk)")

    # Fused heads: layer 0 = exact concat (both read `shared`), layers k>0 =
    # block-diagonal.
    # TODO(synk): for head widths >=128 the block-diagonal weight is half
    # zeros; splitting into two lane-dense matmuls on 128-aligned column
    # slices would halve head-layer MXU work.  For the narrow (<128) heads
    # used here the fusion is already optimal.
    for k in range(len(pi_params)):
        wp, bp = to_io(*pi_params[k])   # (in_p, p_k)
        wv, bv = to_io(*vf_params[k])   # (in_v, v_k)
        if k == 0:
            W = jnp.concatenate([wp, wv], axis=1)
        else:
            p_prev = pi_params[k - 1][0].shape[0]
            v_prev = vf_params[k - 1][0].shape[0]
            p_k, v_k = wp.shape[1], wv.shape[1]
            W = jnp.zeros((p_prev + v_prev, p_k + v_k), jnp.float32)
            W = W.at[:p_prev, :p_k].set(wp)
            W = W.at[p_prev:, p_k:].set(wv)
        layers.append((W, jnp.concatenate([bp, bv])))

    L = len(layers)
    P = _round_up(max(W.shape[1] for (W, _) in layers), 128)
    D_in = layers[0][0].shape[0]
    # (D_in is kept unpadded: a block equal to the full array dim is legal;
    #  for very wide, non-128-aligned feature dims, padding D_in to 128 and
    #  zero-padding the features upstream would make the x load lane-dense.)

    mm_dtype = jnp.bfloat16 if use_bf16_matmul else jnp.float32

    def pad_w(W, rows, cols):
        out = jnp.zeros((rows, cols), jnp.float32)
        return out.at[:W.shape[0], :W.shape[1]].set(W)

    def pad_b(bb):
        return jnp.zeros((P,), jnp.float32).at[:bb.shape[0]].set(bb)

    # Zero columns + zero bias -> tanh(0)=0, and zero rows in the next layer
    # discard them -> padding is numerically exact (0 is exact in bf16 too).
    w0 = pad_w(layers[0][0], D_in, P).astype(mm_dtype)
    if L > 1:
        w_rest = jnp.stack([pad_w(W, P, P) for (W, _) in layers[1:]]).astype(mm_dtype)
    else:
        w_rest = jnp.zeros((1, P, P), mm_dtype)   # unused dummy, keeps arity fixed
    b = jnp.stack([pad_b(bb) for (_, bb) in layers])

    pi_dim = pi_params[-1][0].shape[0]
    vf_dim = vf_params[-1][0].shape[0]
    return PackedParams(w0, w_rest, b, L, P, D_in, pi_dim, vf_dim)


# ----------------------------------------------------------------------------
# Forward wrappers
# ----------------------------------------------------------------------------
def mlp_ac_forward_fused(features, packed: PackedParams):
    """Primary Pallas entry point.

    Returns the lane-dense fused slab of shape (B, P) whose columns
    [0:pi_dim] are latent_pi and [pi_dim:pi_dim+vf_dim] are latent_vf.
    Handing this slab (plus offsets) to the consumer avoids the extra HBM
    read+write that post-kernel column slices would cost at large batch.
    """
    features = jnp.asarray(features, jnp.float32)
    B, D_in = features.shape
    assert D_in == packed.in_dim
    P, L = packed.width, packed.num_layers

    Bt = _pick_batch_tile(B)
    grid = (pl.cdiv(B, Bt),)

    use_bf16 = packed.w0.dtype == jnp.bfloat16
    act_dtype = _activation_dtype(use_bf16)
    kernel = _make_fused_mlp_kernel(L, act_dtype)

    # VMEM budget: single-buffered weights + double-buffered activation tiles
    # + headroom for Mosaic-internal scratch.
    mm_bytes = packed.w0.dtype.itemsize
    weight_bytes = (packed.w0.size * mm_bytes
                    + packed.w_rest.size * mm_bytes
                    + packed.b.size * 4)
    act_bytes = 2 * Bt * D_in * 4 + 2 * Bt * P * 4
    vmem_limit = int(min(max(weight_bytes + act_bytes + (4 << 20), 16 << 20),
                         128 << 20))
    # TODO(synk): if single-buffered weights exceed ~half of v7x's 64 MiB
    # VMEM (very wide/deep nets), stream w_rest per layer (second grid axis
    # or memory_space=pl.ANY + make_async_copy) instead of keeping it resident.

    flops = 2 * B * (D_in * P + max(L - 1, 0) * P * P)
    cost = pl.CostEstimate(
        flops=int(flops),
        transcendentals=int(B * P * L),
        bytes_accessed=int(B * D_in * 4 + weight_bytes + B * P * 4),
    )

    fused = pl.pallas_call(
        kernel,
        out_shape=jax.ShapeDtypeStruct((B, P), jnp.float32),
        grid=grid,
        in_specs=[
            pl.BlockSpec((Bt, D_in), lambda i: (i, 0)),          # streamed tiles
            _const_spec((D_in, P), lambda i: (0, 0)),            # VMEM-resident
            _const_spec(packed.w_rest.shape, lambda i: (0, 0, 0)),
            _const_spec((L, P), lambda i: (0, 0)),
        ],
        out_specs=pl.BlockSpec((Bt, P), lambda i: (i, 0)),
        compiler_params=pltpu.CompilerParams(
            dimension_semantics=("parallel",),
            vmem_limit_bytes=vmem_limit,
        ),
        cost_estimate=cost,
    )(features, packed.w0, packed.w_rest, packed.b)
    return fused


def mlp_ac_forward(features, packed: PackedParams):
    """Convenience wrapper returning (latent_pi, latent_vf).

    NOTE: the column slices below add an extra HBM pass over the (B, P) slab;
    throughput-critical consumers should use mlp_ac_forward_fused() directly.
    """
    fused = mlp_ac_forward_fused(features, packed)
    latent_pi = fused[:, :packed.pi_dim]
    latent_vf = fused[:, packed.pi_dim:packed.pi_dim + packed.vf_dim]
    return latent_pi, latent_vf


# ----------------------------------------------------------------------------
# Deterministic parameter construction (PyTorch-Linear-like uniform init)
# ----------------------------------------------------------------------------
def _init_linear(key, in_dim, out_dim):
    kw, kb = jax.random.split(key)
    bound = 1.0 / jnp.sqrt(jnp.float32(in_dim))
    w = jax.random.uniform(kw, (out_dim, in_dim), jnp.float32, -bound, bound)
    b = jax.random.uniform(kb, (out_dim,), jnp.float32, -bound, bound)
    return w, b


def build_params(key, feature_dim, net_arch):
    """Mirror MlpACNetwork.__init__ layer-shape logic."""
    shared, pi, vf = [], [], []
    last_shared = feature_dim
    last_pi = feature_dim
    last_vf = feature_dim
    for layer in net_arch:
        if isinstance(layer, int):
            key, sub = jax.random.split(key)
            shared.append(_init_linear(sub, last_shared, layer))
            last_shared = layer
        elif isinstance(layer, dict):
            for p_layer in layer["pi"]:
                key, sub = jax.random.split(key)
                pi.append(_init_linear(sub, last_pi, p_layer))
                last_pi = p_layer
            for v_layer in layer["vf"]:
                key, sub = jax.random.split(key)
                vf.append(_init_linear(sub, last_vf, v_layer))
                last_vf = v_layer
            break
    return shared, pi, vf


# ----------------------------------------------------------------------------
# Pure-JAX reference (for correctness sanity check)
# ----------------------------------------------------------------------------
def reference_forward(features, shared_params, pi_params, vf_params):
    def run(h, params):
        for (w, b) in params:
            h = jnp.tanh(h @ w.T + b)
        return h

    shared = run(features, shared_params)
    return run(shared, pi_params), run(shared, vf_params)


if __name__ == "__main__":
    key = jax.random.PRNGKey(0)

    feature_dim = 32
    batch = 8
    # Two shared layers (32, 32) then pi=[64, 64], vf=[64, 64] heads.
    net_arch = [32, 32, dict(pi=[64, 64], vf=[64, 64])]

    k_params, k_x = jax.random.split(key)
    shared_params, pi_params, vf_params = build_params(k_params, feature_dim, net_arch)
    features = jax.random.normal(k_x, (batch, feature_dim), jnp.float32)

    ref_pi, ref_vf = reference_forward(features, shared_params, pi_params, vf_params)

    # f32 path (bit-faithful to the PyTorch module's numerics).
    packed_f32 = prepare_params(feature_dim, shared_params, pi_params, vf_params,
                                use_bf16_matmul=False)
    latent_pi, latent_vf = mlp_ac_forward(features, packed_f32)
    jax.block_until_ready((latent_pi, latent_vf))

    assert latent_pi.shape == (batch, 64) and latent_vf.shape == (batch, 64)
    assert jnp.allclose(latent_pi, ref_pi, atol=1e-4, rtol=1e-4)
    assert jnp.allclose(latent_vf, ref_vf, atol=1e-4, rtol=1e-4)

    # Default (recommended) path: bf16 MXU operands, f32 accumulate, f32 bias,
    # tanh in bf16 on v6e/v7x / f32 on v5e.  Looser tolerance (bf16 rounding).
    packed_bf16 = prepare_params(feature_dim, shared_params, pi_params, vf_params)
    fused = mlp_ac_forward_fused(features, packed_bf16)
    jax.block_until_ready(fused)
    pi_bf16 = fused[:, :packed_bf16.pi_dim]
    vf_bf16 = fused[:, packed_bf16.pi_dim:packed_bf16.pi_dim + packed_bf16.vf_dim]
    assert fused.shape == (batch, packed_bf16.width)
    assert jnp.allclose(pi_bf16, ref_pi, atol=1e-1)
    assert jnp.allclose(vf_bf16, ref_vf, atol=1e-1)

    print("KERNEL_OK")
</pallas_src>

<mosaic_0001>
module attributes {stable_mosaic.version = 11 : i64} {
  func.func @kernel(%arg0: i32, %arg1: memref<8x32xf32, #tpu.memory_space<vmem>>, %arg2: memref<32x128xf32, #tpu.memory_space<vmem>>, %arg3: memref<3x128x128xf32, #tpu.memory_space<vmem>>, %arg4: memref<4x128xf32, #tpu.memory_space<vmem>>, %arg5: memref<8x128xf32, #tpu.memory_space<vmem>>) attributes {dimension_semantics = [#tpu.dimension_semantics<parallel>], iteration_bounds = array<i64: 1>, scalar_prefetch = 0 : i64, scratch_operands = 0 : i64, tpu.core_type = #tpu.core_type<tc>, window_params = [{transform_indices = @transform_0, window_bounds = array<i64: 8, 32>}, {pipeline_mode = #tpu.pipeline_mode<synchronous>, transform_indices = @transform_1, window_bounds = array<i64: 32, 128>}, {pipeline_mode = #tpu.pipeline_mode<synchronous>, transform_indices = @transform_2, window_bounds = array<i64: 3, 128, 128>}, {pipeline_mode = #tpu.pipeline_mode<synchronous>, transform_indices = @transform_3, window_bounds = array<i64: 4, 128>}, {transform_indices = @transform_4, window_bounds = array<i64: 8, 128>}]} {
    %c0 = arith.constant 0 : index
    %c0_0 = arith.constant 0 : index
    %0 = vector.load %arg2[%c0, %c0_0] : memref<32x128xf32, #tpu.memory_space<vmem>>, vector<32x128xf32>
    %c0_1 = arith.constant 0 : index
    %c0_2 = arith.constant 0 : index
    %1 = vector.load %arg1[%c0_1, %c0_2] : memref<8x32xf32, #tpu.memory_space<vmem>>, vector<8x32xf32>
    %cst = arith.constant dense<0.000000e+00> : vector<8x128xf32>
    %2 = tpu.matmul %1, %0, %cst {dimension_numbers = #tpu.dot_dimension_numbers<[1], [0], [0], [1], [0, 0, 1, 1], [], []>} : vector<8x32xf32>, vector<32x128xf32>, vector<8x128xf32> -> vector<8x128xf32>
    %c0_3 = arith.constant 0 : index
    %c0_4 = arith.constant 0 : index
    %3 = vector.load %arg4[%c0_3, %c0_4] : memref<4x128xf32, #tpu.memory_space<vmem>>, vector<1x128xf32>
    %4 = vector.broadcast %3 : vector<1x128xf32> to vector<8x128xf32>
    %5 = arith.addf %2, %4 : vector<8x128xf32>
    %6 = math.tanh %5 : vector<8x128xf32>
    %c0_5 = arith.constant 0 : index
    %c0_6 = arith.constant 0 : index
    %c0_7 = arith.constant 0 : index
    %7 = vector.load %arg3[%c0_5, %c0_6, %c0_7] : memref<3x128x128xf32, #tpu.memory_space<vmem>>, vector<1x128x128xf32>
    %8 = vector.shape_cast %7 : vector<1x128x128xf32> to vector<128x128xf32>
    %cst_8 = arith.constant dense<0.000000e+00> : vector<8x128xf32>
    %9 = tpu.matmul %6, %8, %cst_8 {dimension_numbers = #tpu.dot_dimension_numbers<[1], [0], [0], [1], [0, 0, 1, 1], [], []>} : vector<8x128xf32>, vector<128x128xf32>, vector<8x128xf32> -> vector<8x128xf32>
    %c1 = arith.constant 1 : index
    %c0_9 = arith.constant 0 : index
    %10 = vector.load %arg4[%c1, %c0_9] : memref<4x128xf32, #tpu.memory_space<vmem>>, vector<1x128xf32>
    %11 = vector.broadcast %10 : vector<1x128xf32> to vector<8x128xf32>
    %12 = arith.addf %9, %11 : vector<8x128xf32>
    %13 = math.tanh %12 : vector<8x128xf32>
    %c1_10 = arith.constant 1 : index
    %c0_11 = arith.constant 0 : index
    %c0_12 = arith.constant 0 : index
    %14 = vector.load %arg3[%c1_10, %c0_11, %c0_12] : memref<3x128x128xf32, #tpu.memory_space<vmem>>, vector<1x128x128xf32>
    %15 = vector.shape_cast %14 : vector<1x128x128xf32> to vector<128x128xf32>
    %cst_13 = arith.constant dense<0.000000e+00> : vector<8x128xf32>
    %16 = tpu.matmul %13, %15, %cst_13 {dimension_numbers = #tpu.dot_dimension_numbers<[1], [0], [0], [1], [0, 0, 1, 1], [], []>} : vector<8x128xf32>, vector<128x128xf32>, vector<8x128xf32> -> vector<8x128xf32>
    %c2 = arith.constant 2 : index
    %c0_14 = arith.constant 0 : index
    %17 = vector.load %arg4[%c2, %c0_14] : memref<4x128xf32, #tpu.memory_space<vmem>>, vector<1x128xf32>
    %18 = vector.broadcast %17 : vector<1x128xf32> to vector<8x128xf32>
    %19 = arith.addf %16, %18 : vector<8x128xf32>
    %20 = math.tanh %19 : vector<8x128xf32>
    %c2_15 = arith.constant 2 : index
    %c0_16 = arith.constant 0 : index
    %c0_17 = arith.constant 0 : index
    %21 = vector.load %arg3[%c2_15, %c0_16, %c0_17] : memref<3x128x128xf32, #tpu.memory_space<vmem>>, vector<1x128x128xf32>
    %22 = vector.shape_cast %21 : vector<1x128x128xf32> to vector<128x128xf32>
    %cst_18 = arith.constant dense<0.000000e+00> : vector<8x128xf32>
    %23 = tpu.matmul %20, %22, %cst_18 {dimension_numbers = #tpu.dot_dimension_numbers<[1], [0], [0], [1], [0, 0, 1, 1], [], []>} : vector<8x128xf32>, vector<128x128xf32>, vector<8x128xf32> -> vector<8x128xf32>
    %c3 = arith.constant 3 : index
    %c0_19 = arith.constant 0 : index
    %24 = vector.load %arg4[%c3, %c0_19] : memref<4x128xf32, #tpu.memory_space<vmem>>, vector<1x128xf32>
    %25 = vector.broadcast %24 : vector<1x128xf32> to vector<8x128xf32>
    %26 = arith.addf %23, %25 : vector<8x128xf32>
    %27 = math.tanh %26 : vector<8x128xf32>
    %c0_20 = arith.constant 0 : index
    %c0_21 = arith.constant 0 : index
    %28 = vector.load %arg5[%c0_20, %c0_21] : memref<8x128xf32, #tpu.memory_space<vmem>>, vector<8x128xf32>
    tpu.vector_store %arg5[%c0_20, %c0_21], %27 {strides = array<i32>} : memref<8x128xf32, #tpu.memory_space<vmem>>, vector<8x128xf32>,
    return
  }
  func.func @transform_0(%arg0: i32) -> (i32, i32) {
    %c0_i32 = arith.constant 0 : i32
    %c0_i32_0 = arith.constant 0 : i32
    return %arg0, %c0_i32 : i32, i32
  }
  func.func @transform_1(%arg0: i32) -> (i32, i32) {
    %c0_i32 = arith.constant 0 : i32
    %c0_i32_0 = arith.constant 0 : i32
    %c0_i32_1 = arith.constant 0 : i32
    return %c0_i32, %c0_i32_0 : i32, i32
  }
  func.func @transform_2(%arg0: i32) -> (i32, i32, i32) {
    %c0_i32 = arith.constant 0 : i32
    %c0_i32_0 = arith.constant 0 : i32
    %c0_i32_1 = arith.constant 0 : i32
    %c0_i32_2 = arith.constant 0 : i32
    return %c0_i32, %c0_i32_0, %c0_i32_1 : i32, i32, i32
  }
  func.func @transform_3(%arg0: i32) -> (i32, i32) {
    %c0_i32 = arith.constant 0 : i32
    %c0_i32_0 = arith.constant 0 : i32
    %c0_i32_1 = arith.constant 0 : i32
    return %c0_i32, %c0_i32_0 : i32, i32
  }
  func.func @transform_4(%arg0: i32) -> (i32, i32) {
    %c0_i32 = arith.constant 0 : i32
    %c0_i32_0 = arith.constant 0 : i32
    return %arg0, %c0_i32 : i32, i32
  }
}

</mosaic_0001>

<llo_original>
// kernel: tpu_custom_call.1
$region0: #{tpu_custom_call.1}
  #allocation0 [shape = 'u32[]', space=smem, size = 0x4, offset = 0x4, fixed_abs, tag = 'smem constant byte address 0x4 - core index']
  #allocation1 [shape = 'u32[144,128]{1,0:T(1,128)}', space=vmem, size = 0x12000, scoped, tag = 'internal scratch']
  %s0 = inlined_call_operand.hbm [shape: f32[8,32], index: 0, kind: input, shape index: {}]
  %s1 = inlined_call_operand.hbm [shape: f32[32,128], index: 1, kind: input, shape index: {}]
  %s2 = inlined_call_operand.hbm [shape: f32[3,128,128], index: 2, kind: input, shape index: {}]
  %s3 = inlined_call_operand.vmem [shape: f32[4,128], index: 3, kind: input, shape index: {}]
  %s4 = inlined_call_operand.hbm [shape: f32[8,128], index: 4, kind: output, shape index: {}]
  %s5 = sld [smem:[#allocation0]]
  $region38: #{tpu_custom_call.1} parent=0
    _
  %s7 = ssub.s32 1, %s5
  %s8 = scalar_select 0, %s7, %s5
  $region1: #{tpu_custom_call.1} parent=0
    #allocation2 [shape = 'u8[4096]{0}', space=vmem, size = 0x1000, scoped, tag = 'input window, operand 0, single buffered']
    #allocation3 [shape = 's32[1]{0}', space=sflag, size = 0x4, scoped, tag = 'scoped memory for tpu_custom_call.1']
    #allocation4 [shape = 's32[1]{0}', space=sflag, size = 0x4, scoped, tag = 'scoped memory for tpu_custom_call.1']
    #allocation5 [shape = 'u8[16384]{0}', space=vmem, size = 0x4000, scoped, tag = 'input window, operand 1, single buffered']
    #allocation6 [shape = 's32[1]{0}', space=sflag, size = 0x4, scoped, tag = 'scoped memory for tpu_custom_call.1']
    #allocation7 [shape = 'u8[196608]{0}', space=vmem, size = 0x30000, scoped, tag = 'input window, operand 2, single buffered']
    #allocation8 [shape = 'u8[4096]{0}', space=vmem, size = 0x1000, scoped, tag = 'output window, operand 0, single buffered']
    %9 = vsyncpa [#allocation3], 0
    %10 = vsyncpa [#allocation6], 0
    %11 = vsyncpa [#allocation4], 0
    // Predicated region
    $region2: #{tpu_custom_call.1} parent=1 // pred_check
      _
    $region3: #{tpu_custom_call.1} parent=1 // pred_check_branch
      %13 = sbr.rel (0) target = $region5
    $region4: #{tpu_custom_call.1} parent=1 // pred_region
      %s15 = ssub.s32 128, 128
      %16 = vsyncadd [#allocation3], %s15
      %s18 = sshll.u32 [#allocation2], 4
      %s19 = int_to_ptr.vmem [resolvable:$true] %s18
      %21 = dma.hbm_to_vmem [thread:$0]  %s0, 128, %s19, [#allocation3]
    $region5: #{tpu_custom_call.1} parent=1 // pred_fallthru
      _
    // Predicated region
    $region6: #{tpu_custom_call.1} parent=1 // pred_check
      _
    $region7: #{tpu_custom_call.1} parent=1 // pred_check_branch
      %23 = sbr.rel (0) target = $region9
    $region8: #{tpu_custom_call.1} parent=1 // pred_region
      %s25 = ssub.s32 512, 512
      %26 = vsyncadd [#allocation6], %s25
      %s27 = sshll.u32 [#allocation5], 4
      %s28 = int_to_ptr.vmem [resolvable:$true] %s27
      %33 = dma.hbm_to_vmem [thread:$0]  %s1, 512, %s28, [#allocation6], 128, 128, 8
    $region9: #{tpu_custom_call.1} parent=1 // pred_fallthru
      _
    // Predicated region
    $region10: #{tpu_custom_call.1} parent=1 // pred_check
      _
    $region11: #{tpu_custom_call.1} parent=1 // pred_check_branch
      %35 = sbr.rel (0) target = $region13
    $region12: #{tpu_custom_call.1} parent=1 // pred_region
      %s37 = ssub.s32 6144, 6144
      %38 = vsyncadd [#allocation6], %s37
      %s39 = sshll.u32 [#allocation7], 4
      %s40 = int_to_ptr.vmem [resolvable:$true] %s39
      %45 = dma.hbm_to_vmem [thread:$0]  %s2, 6144, %s40, [#allocation6], 128, 128, 8
    $region13: #{tpu_custom_call.1} parent=1 // pred_fallthru
      _
    // Predicated region
    $region14: #{tpu_custom_call.1} parent=1 // pred_check
      _
    $region15: #{tpu_custom_call.1} parent=1 // pred_check_branch
      %47 = sbr.rel (0) target = $region17
    $region16: #{tpu_custom_call.1} parent=1 // pred_region
      _
    $region17: #{tpu_custom_call.1} parent=1 // pred_fallthru
      _
    // Predicated region
    $region18: #{tpu_custom_call.1} parent=1 // pred_check
      _
    $region19: #{tpu_custom_call.1} parent=1 // pred_check_branch
      %49 = sbr.rel (0) target = $region21
    $region20: #{tpu_custom_call.1} parent=1 // pred_region
      %50 = dma.done [#allocation3], 128
    $region21: #{tpu_custom_call.1} parent=1 // pred_fallthru
      _
    // Predicated region
    $region22: #{tpu_custom_call.1} parent=1 // pred_check
      _
    $region23: #{tpu_custom_call.1} parent=1 // pred_check_branch
      %52 = sbr.rel (0) target = $region25
    $region24: #{tpu_custom_call.1} parent=1 // pred_region
      %53 = dma.done [#allocation6], 512
    $region25: #{tpu_custom_call.1} parent=1 // pred_fallthru
      _
    // Predicated region
    $region26: #{tpu_custom_call.1} parent=1 // pred_check
      _
    $region27: #{tpu_custom_call.1} parent=1 // pred_check_branch
      %55 = sbr.rel (0) target = $region29
    $region28: #{tpu_custom_call.1} parent=1 // pred_region
      %56 = dma.done [#allocation6], 6144
    $region29: #{tpu_custom_call.1} parent=1 // pred_fallthru
      _
    %v57 = vld [vmem:[#allocation5] sm:$0xff]
    %v58 = vld [vmem:[#allocation5 + $0x8] sm:$0xff]
    %v59 = vld [vmem:[#allocation5 + $0x10] sm:$0xff]
    %v60 = vld [vmem:[#allocation5 + $0x18] sm:$0xff]
    %v61 = vld [vmem:[#allocation2] sm:$0xff]
    %v62 = vld [vmem:[%s3] sm:$0x1]
    %v63 = vlaneseq
    %v64 = vshrl.u32 %v63, 7
    %v65 = vsub.s32 0, %v64
    %v66 = vrot.slane %v62, %v65
    %vm67 = vcmask 261120
    %v69 = vsel %vm67, %v61, 0
    %71 = vmatprep.subr.mxu0 0.0
    %72 = vmatpush1.msra.mxu0 0.0
    %73 = vmatprep.subr.mxu0 0.0
    %74 = vmatpush1.msra.mxu0 0.0
    %75 = vmatprep.subr.mxu0 0.0
    %76 = vmatpush1.msra.mxu0 0.0
    %77 = vmatprep.subr.mxu0 0.0
    %78 = vmatpush1.msra.mxu0 0.0
    %79 = vmatprep.subr.mxu0 0.0
    %80 = vmatpush1.msra.mxu0 0.0
    %81 = vmatprep.subr.mxu0 0.0
    %82 = vmatpush1.msra.mxu0 0.0
    %83 = vmatprep.subr.mxu0 0.0
    %84 = vmatpush1.msra.mxu0 0.0
    %85 = vmatprep.subr.mxu0 0.0
    %86 = vmatpush1.msra.mxu0 0.0
    %87 = vmatprep.subr.mxu0 0.0
    %88 = vmatpush1.msra.mxu0 0.0
    %89 = vmatprep.subr.mxu0 0.0
    %90 = vmatpush1.msra.mxu0 0.0
    %91 = vmatprep.subr.mxu0 0.0
    %92 = vmatpush1.msra.mxu0 0.0
    %93 = vmatprep.subr.mxu0 0.0
    %94 = vmatpush1.msra.mxu0 0.0
    %95 = vmatprep.subr.mxu0 0.0
    %96 = vmatpush1.msra.mxu0 %v60
    %97 = vmatprep.subr.mxu0 0.0
    %98 = vmatpush1.msra.mxu0 %v59
    %99 = vmatprep.subr.mxu0 0.0
    %100 = vmatpush1.msra.mxu0 %v58
    %101 = vmatprep.subr.mxu0 0.0
    %102 = vmatpush1.msra.mxu0 %v57
    %103 = vmatprep.subr.mxu0 0.0
    %104 = vmatpush2.msra.mxu0 0.0
    %105 = vmatprep.subr.mxu0 0.0
    %106 = vmatpush2.msra.mxu0 0.0
    %107 = vmatprep.subr.mxu0 0.0
    %108 = vmatpush2.msra.mxu0 0.0
    %109 = vmatprep.subr.mxu0 0.0
    %110 = vmatpush2.msra.mxu0 0.0
    %111 = vmatprep.subr.mxu0 0.0
    %112 = vmatpush2.msra.mxu0 0.0
    %113 = vmatprep.subr.mxu0 0.0
    %114 = vmatpush2.msra.mxu0 0.0
    %115 = vmatprep.subr.mxu0 0.0
    %116 = vmatpush2.msra.mxu0 0.0
    %117 = vmatprep.subr.mxu0 0.0
    %118 = vmatpush2.msra.mxu0 0.0
    %119 = vmatprep.subr.mxu0 0.0
    %120 = vmatpush2.msra.mxu0 0.0
    %121 = vmatprep.subr.mxu0 0.0
    %122 = vmatpush2.msra.mxu0 0.0
    %123 = vmatprep.subr.mxu0 0.0
    %124 = vmatpush2.msra.mxu0 0.0
    %125 = vmatprep.subr.mxu0 0.0
    %126 = vmatpush2.msra.mxu0 0.0
    %127 = vmatprep.subr.mxu0 0.0
    %128 = vmatpush2.msra.mxu0 0.0
    %129 = vmatprep.subr.mxu0 0.0
    %130 = vmatpush2.msra.mxu0 0.0
    %131 = vmatprep.subr.mxu0 0.0
    %132 = vmatpush2.msra.mxu0 0.0
    %133 = vmatprep.subr.mxu0 0.0
    %134 = vmatpush2.msra.mxu0 0.0
    %135 = vmatprep.mubr.f32.mxu0 0.0
    %136 = vmatmul.mubr.f32.gmra.mxu0 %v69
    %v137 = vpop.f32.mrf.mxu0
    %v138 = vadd.f32 %v66, %v137
    %v139 = vpop.f32.mrf.mxu0
    %140 = vdwg.mxu0
    %v141 = vtanh.pop %v138
    %v142 = vld [vmem:[#allocation7] sm:$0xff]
    %v143 = vld [vmem:[#allocation7 + $0x8] sm:$0xff]
    %v144 = vld [vmem:[#allocation7 + $0x10] sm:$0xff]
    %v145 = vld [vmem:[#allocation7 + $0x18] sm:$0xff]
    %v146 = vld [vmem:[#allocation7 + $0x20] sm:$0xff]
    %v147 = vld [vmem:[#allocation7 + $0x28] sm:$0xff]
    %v148 = vld [vmem:[#allocation7 + $0x30] sm:$0xff]
    %v149 = vld [vmem:[#allocation7 + $0x38] sm:$0xff]
    %v150 = vld [vmem:[#allocation7 + $0x40] sm:$0xff]
    %v151 = vld [vmem:[#allocation7 + $0x48] sm:$0xff]
    %v152 = vld [vmem:[#allocation7 + $0x50] sm:$0xff]
    %v153 = vld [vmem:[#allocation7 + $0x58] sm:$0xff]
    %v154 = vld [vmem:[#allocation7 + $0x60] sm:$0xff]
    %v155 = vld [vmem:[#allocation7 + $0x68] sm:$0xff]
    %v156 = vld [vmem:[#allocation7 + $0x70] sm:$0xff]
    %v157 = vld [vmem:[#allocation7 + $0x78] sm:$0xff]
    %v158 = vld [vmem:[%s3 + $0x1] sm:$0x1]
    %v159 = vlaneseq
    %v160 = vshrl.u32 %v159, 7
    %v161 = vsub.s32 0, %v160
    %v162 = vrot.slane %v158, %v161
    %163 = vmatprep.subr.mxu0 0.0
    %164 = vmatpush1.msra.mxu0 %v157
    %165 = vmatprep.subr.mxu0 0.0
    %166 = vmatpush1.msra.mxu0 %v156
    %167 = vmatprep.subr.mxu0 0.0
    %168 = vmatpush1.msra.mxu0 %v155
    %169 = vmatprep.subr.mxu0 0.0
    %170 = vmatpush1.msra.mxu0 %v154
    %171 = vmatprep.subr.mxu0 0.0
    %172 = vmatpush1.msra.mxu0 %v153
    %173 = vmatprep.subr.mxu0 0.0
    %174 = vmatpush1.msra.mxu0 %v152
    %175 = vmatprep.subr.mxu0 0.0
    %176 = vmatpush1.msra.mxu0 %v151
    %177 = vmatprep.subr.mxu0 0.0
    %178 = vmatpush1.msra.mxu0 %v150
    %179 = vmatprep.subr.mxu0 0.0
    %180 = vmatpush1.msra.mxu0 %v149
    %181 = vmatprep.subr.mxu0 0.0
    %182 = vmatpush1.msra.mxu0 %v148
    %183 = vmatprep.subr.mxu0 0.0
    %184 = vmatpush1.msra.mxu0 %v147
    %185 = vmatprep.subr.mxu0 0.0
    %186 = vmatpush1.msra.mxu0 %v146
    %187 = vmatprep.subr.mxu0 0.0
    %188 = vmatpush1.msra.mxu0 %v145
    %189 = vmatprep.subr.mxu0 0.0
    %190 = vmatpush1.msra.mxu0 %v144
    %191 = vmatprep.subr.mxu0 0.0
    %192 = vmatpush1.msra.mxu0 %v143
    %193 = vmatprep.subr.mxu0 0.0
    %194 = vmatpush1.msra.mxu0 %v142
    %195 = vmatprep.subr.mxu0 0.0
    %196 = vmatpush2.msra.mxu0 0.0
    %197 = vmatprep.subr.mxu0 0.0
    %198 = vmatpush2.msra.mxu0 0.0
    %199 = vmatprep.subr.mxu0 0.0
    %200 = vmatpush2.msra.mxu0 0.0
    %201 = vmatprep.subr.mxu0 0.0
    %202 = vmatpush2.msra.mxu0 0.0
    %203 = vmatprep.subr.mxu0 0.0
    %204 = vmatpush2.msra.mxu0 0.0
    %205 = vmatprep.subr.mxu0 0.0
    %206 = vmatpush2.msra.mxu0 0.0
    %207 = vmatprep.subr.mxu0 0.0
    %208 = vmatpush2.msra.mxu0 0.0
    %209 = vmatprep.subr.mxu0 0.0
    %210 = vmatpush2.msra.mxu0 0.0
    %211 = vmatprep.subr.mxu0 0.0
    %212 = vmatpush2.msra.mxu0 0.0
    %213 = vmatprep.subr.mxu0 0.0
    %214 = vmatpush2.msra.mxu0 0.0
    %215 = vmatprep.subr.mxu0 0.0
    %216 = vmatpush2.msra.mxu0 0.0
    %217 = vmatprep.subr.mxu0 0.0
    %218 = vmatpush2.msra.mxu0 0.0
    %219 = vmatprep.subr.mxu0 0.0
    %220 = vmatpush2.msra.mxu0 0.0
    %221 = vmatprep.subr.mxu0 0.0
    %222 = vmatpush2.msra.mxu0 0.0
    %223 = vmatprep.subr.mxu0 0.0
    %224 = vmatpush2.msra.mxu0 0.0
    %225 = vmatprep.subr.mxu0 0.0
    %226 = vmatpush2.msra.mxu0 0.0
    %227 = vmatprep.mubr.f32.mxu0 0.0
    %228 = vmatmul.mubr.f32.gmra.mxu0 %v141
    %v229 = vpop.f32.mrf.mxu0
    %v230 = vadd.f32 %v162, %v229
    %v231 = vpop.f32.mrf.mxu0
    %232 = vdwg.mxu0
    %v233 = vtanh.pop %v230
    %s234 = scalar_lea.vmem [#allocation7], 128
    %v235 = vld [vmem:[%s234] sm:$0xff]
    %v236 = vld [vmem:[%s234 + $0x8] sm:$0xff]
    %v237 = vld [vmem:[%s234 + $0x10] sm:$0xff]
    %v238 = vld [vmem:[%s234 + $0x18] sm:$0xff]
    %v239 = vld [vmem:[%s234 + $0x20] sm:$0xff]
    %v240 = vld [vmem:[%s234 + $0x28] sm:$0xff]
    %v241 = vld [vmem:[%s234 + $0x30] sm:$0xff]
    %v242 = vld [vmem:[%s234 + $0x38] sm:$0xff]
    %v243 = vld [vmem:[%s234 + $0x40] sm:$0xff]
    %v244 = vld [vmem:[%s234 + $0x48] sm:$0xff]
    %v245 = vld [vmem:[%s234 + $0x50] sm:$0xff]
    %v246 = vld [vmem:[%s234 + $0x58] sm:$0xff]
    %v247 = vld [vmem:[%s234 + $0x60] sm:$0xff]
    %v248 = vld [vmem:[%s234 + $0x68] sm:$0xff]
    %v249 = vld [vmem:[%s234 + $0x70] sm:$0xff]
    %v250 = vld [vmem:[%s234 + $0x78] sm:$0xff]
    %v251 = vld [vmem:[%s3 + $0x2] sm:$0x1]
    %v252 = vlaneseq
    %v253 = vshrl.u32 %v252, 7
    %v254 = vsub.s32 0, %v253
    %v255 = vrot.slane %v251, %v254
    %256 = vmatprep.subr.mxu0 0.0
    %257 = vmatpush1.msra.mxu0 %v250
    %258 = vmatprep.subr.mxu0 0.0
    %259 = vmatpush1.msra.mxu0 %v249
    %260 = vmatprep.subr.mxu0 0.0
    %261 = vmatpush1.msra.mxu0 %v248
    %262 = vmatprep.subr.mxu0 0.0
    %263 = vmatpush1.msra.mxu0 %v247
    %264 = vmatprep.subr.mxu0 0.0
    %265 = vmatpush1.msra.mxu0 %v246
    %266 = vmatprep.subr.mxu0 0.0
    %267 = vmatpush1.msra.mxu0 %v245
    %268 = vmatprep.subr.mxu0 0.0
    %269 = vmatpush1.msra.mxu0 %v244
    %270 = vmatprep.subr.mxu0 0.0
    %271 = vmatpush1.msra.mxu0 %v243
    %272 = vmatprep.subr.mxu0 0.0
    %273 = vmatpush1.msra.mxu0 %v242
    %274 = vmatprep.subr.mxu0 0.0
    %275 = vmatpush1.msra.mxu0 %v241
    %276 = vmatprep.subr.mxu0 0.0
    %277 = vmatpush1.msra.mxu0 %v240
    %278 = vmatprep.subr.mxu0 0.0
    %279 = vmatpush1.msra.mxu0 %v239
    %280 = vmatprep.subr.mxu0 0.0
    %281 = vmatpush1.msra.mxu0 %v238
    %282 = vmatprep.subr.mxu0 0.0
    %283 = vmatpush1.msra.mxu0 %v237
    %284 = vmatprep.subr.mxu0 0.0
    %285 = vmatpush1.msra.mxu0 %v236
    %286 = vmatprep.subr.mxu0 0.0
    %287 = vmatpush1.msra.mxu0 %v235
    %288 = vmatprep.subr.mxu0 0.0
    %289 = vmatpush2.msra.mxu0 0.0
    %290 = vmatprep.subr.mxu0 0.0
    %291 = vmatpush2.msra.mxu0 0.0
    %292 = vmatprep.subr.mxu0 0.0
    %293 = vmatpush2.msra.mxu0 0.0
    %294 = vmatprep.subr.mxu0 0.0
    %295 = vmatpush2.msra.mxu0 0.0
    %296 = vmatprep.subr.mxu0 0.0
    %297 = vmatpush2.msra.mxu0 0.0
    %298 = vmatprep.subr.mxu0 0.0
    %299 = vmatpush2.msra.mxu0 0.0
    %300 = vmatprep.subr.mxu0 0.0
    %301 = vmatpush2.msra.mxu0 0.0
    %302 = vmatprep.subr.mxu0 0.0
    %303 = vmatpush2.msra.mxu0 0.0
    %304 = vmatprep.subr.mxu0 0.0
    %305 = vmatpush2.msra.mxu0 0.0
    %306 = vmatprep.subr.mxu0 0.0
    %307 = vmatpush2.msra.mxu0 0.0
    %308 = vmatprep.subr.mxu0 0.0
    %309 = vmatpush2.msra.mxu0 0.0
    %310 = vmatprep.subr.mxu0 0.0
    %311 = vmatpush2.msra.mxu0 0.0
    %312 = vmatprep.subr.mxu0 0.0
    %313 = vmatpush2.msra.mxu0 0.0
    %314 = vmatprep.subr.mxu0 0.0
    %315 = vmatpush2.msra.mxu0 0.0
    %316 = vmatprep.subr.mxu0 0.0
    %317 = vmatpush2.msra.mxu0 0.0
    %318 = vmatprep.subr.mxu0 0.0
    %319 = vmatpush2.msra.mxu0 0.0
    %320 = vmatprep.mubr.f32.mxu0 0.0
    %321 = vmatmul.mubr.f32.gmra.mxu0 %v233
    %v322 = vpop.f32.mrf.mxu0
    %v323 = vadd.f32 %v255, %v322
    %v324 = vpop.f32.mrf.mxu0
    %325 = vdwg.mxu0
    %v326 = vtanh.pop %v323
    %s327 = scalar_lea.vmem [#allocation7], 256
    %v328 = vld [vmem:[%s327] sm:$0xff]
    %v329 = vld [vmem:[%s327 + $0x8] sm:$0xff]
    %v330 = vld [vmem:[%s327 + $0x10] sm:$0xff]
    %v331 = vld [vmem:[%s327 + $0x18] sm:$0xff]
    %v332 = vld [vmem:[%s327 + $0x20] sm:$0xff]
    %v333 = vld [vmem:[%s327 + $0x28] sm:$0xff]
    %v334 = vld [vmem:[%s327 + $0x30] sm:$0xff]
    %v335 = vld [vmem:[%s327 + $0x38] sm:$0xff]
    %v336 = vld [vmem:[%s327 + $0x40] sm:$0xff]
    %v337 = vld [vmem:[%s327 + $0x48] sm:$0xff]
    %v338 = vld [vmem:[%s327 + $0x50] sm:$0xff]
    %v339 = vld [vmem:[%s327 + $0x58] sm:$0xff]
    %v340 = vld [vmem:[%s327 + $0x60] sm:$0xff]
    %v341 = vld [vmem:[%s327 + $0x68] sm:$0xff]
    %v342 = vld [vmem:[%s327 + $0x70] sm:$0xff]
    %v343 = vld [vmem:[%s327 + $0x78] sm:$0xff]
    %v344 = vld [vmem:[%s3 + $0x3] sm:$0x1]
    %v345 = vlaneseq
    %v346 = vshrl.u32 %v345, 7
    %v347 = vsub.s32 0, %v346
    %v348 = vrot.slane %v344, %v347
    %349 = vmatprep.subr.mxu0 0.0
    %350 = vmatpush1.msra.mxu0 %v343
    %351 = vmatprep.subr.mxu0 0.0
    %352 = vmatpush1.msra.mxu0 %v342
    %353 = vmatprep.subr.mxu0 0.0
    %354 = vmatpush1.msra.mxu0 %v341
    %355 = vmatprep.subr.mxu0 0.0
    %356 = vmatpush1.msra.mxu0 %v340
    %357 = vmatprep.subr.mxu0 0.0
    %358 = vmatpush1.msra.mxu0 %v339
    %359 = vmatprep.subr.mxu0 0.0
    %360 = vmatpush1.msra.mxu0 %v338
    %361 = vmatprep.subr.mxu0 0.0
    %362 = vmatpush1.msra.mxu0 %v337
    %363 = vmatprep.subr.mxu0 0.0
    %364 = vmatpush1.msra.mxu0 %v336
    %365 = vmatprep.subr.mxu0 0.0
    %366 = vmatpush1.msra.mxu0 %v335
    %367 = vmatprep.subr.mxu0 0.0
    %368 = vmatpush1.msra.mxu0 %v334
    %369 = vmatprep.subr.mxu0 0.0
    %370 = vmatpush1.msra.mxu0 %v333
    %371 = vmatprep.subr.mxu0 0.0
    %372 = vmatpush1.msra.mxu0 %v332
    %373 = vmatprep.subr.mxu0 0.0
    %374 = vmatpush1.msra.mxu0 %v331
    %375 = vmatprep.subr.mxu0 0.0
    %376 = vmatpush1.msra.mxu0 %v330
    %377 = vmatprep.subr.mxu0 0.0
    %378 = vmatpush1.msra.mxu0 %v329
    %379 = vmatprep.subr.mxu0 0.0
    %380 = vmatpush1.msra.mxu0 %v328
    %381 = vmatprep.subr.mxu0 0.0
    %382 = vmatpush2.msra.mxu0 0.0
    %383 = vmatprep.subr.mxu0 0.0
    %384 = vmatpush2.msra.mxu0 0.0
    %385 = vmatprep.subr.mxu0 0.0
    %386 = vmatpush2.msra.mxu0 0.0
    %387 = vmatprep.subr.mxu0 0.0
    %388 = vmatpush2.msra.mxu0 0.0
    %389 = vmatprep.subr.mxu0 0.0
    %390 = vmatpush2.msra.mxu0 0.0
    %391 = vmatprep.subr.mxu0 0.0
    %392 = vmatpush2.msra.mxu0 0.0
    %393 = vmatprep.subr.mxu0 0.0
    %394 = vmatpush2.msra.mxu0 0.0
    %395 = vmatprep.subr.mxu0 0.0
    %396 = vmatpush2.msra.mxu0 0.0
    %397 = vmatprep.subr.mxu0 0.0
    %398 = vmatpush2.msra.mxu0 0.0
    %399 = vmatprep.subr.mxu0 0.0
    %400 = vmatpush2.msra.mxu0 0.0
    %401 = vmatprep.subr.mxu0 0.0
    %402 = vmatpush2.msra.mxu0 0.0
    %403 = vmatprep.subr.mxu0 0.0
    %404 = vmatpush2.msra.mxu0 0.0
    %405 = vmatprep.subr.mxu0 0.0
    %406 = vmatpush2.msra.mxu0 0.0
    %407 = vmatprep.subr.mxu0 0.0
    %408 = vmatpush2.msra.mxu0 0.0
    %409 = vmatprep.subr.mxu0 0.0
    %410 = vmatpush2.msra.mxu0 0.0
    %411 = vmatprep.subr.mxu0 0.0
    %412 = vmatpush2.msra.mxu0 0.0
    %413 = vmatprep.mubr.f32.mxu0 0.0
    %414 = vmatmul.mubr.f32.gmra.mxu0 %v326
    %v415 = vpop.f32.mrf.mxu0
    %v416 = vadd.f32 %v348, %v415
    %v417 = vpop.f32.mrf.mxu0
    %418 = vdwg.mxu0
    %v419 = vtanh.pop %v416
    %420 = vst [vmem:[#allocation8] sm:$0xff] %v419
    // Predicated region
    $region30: #{tpu_custom_call.1} parent=1 // pred_check
      _
    $region31: #{tpu_custom_call.1} parent=1 // pred_check_branch
      %422 = sbr.rel (0) target = $region33
    $region32: #{tpu_custom_call.1} parent=1 // pred_region
      %s424 = ssub.s32 128, 128
      %425 = vsyncadd [#allocation4], %s424
      %s427 = sshll.u32 [#allocation8], 4
      %s428 = int_to_ptr.vmem [resolvable:$true] %s427
      %430 = dma.vmem_to_hbm [thread:$0]  %s428, 128, %s4, [#allocation4]
    $region33: #{tpu_custom_call.1} parent=1 // pred_fallthru
      _
    // Predicated region
    $region34: #{tpu_custom_call.1} parent=1 // pred_check
      _
    $region35: #{tpu_custom_call.1} parent=1 // pred_check_branch
      %432 = sbr.rel (0) target = $region37
    $region36: #{tpu_custom_call.1} parent=1 // pred_region
      %433 = dma.done [#allocation4], 128
    $region37: #{tpu_custom_call.1} parent=1 // pred_fallthru
      _
    %434 = vsyncpa [#allocation3], 1
    %435 = vsyncpa [#allocation6], 1
    %436 = vsyncpa [#allocation4], 1

</llo_original>
